<compile_context>
chip_gen: v7x
topology: tpu7x:2x2x1
jax: 0.10.0
libtpu: 0.0.40
codegen_flags: <defaults>
</compile_context>

<pallas_src>
import functools
import math

import jax
import jax.numpy as jnp
from jax import lax
from jax.experimental import pallas as pl
from jax.experimental.pallas import tpu as pltpu


def _pick_tile(dim, candidates):
    """Largest candidate that exactly divides `dim`, else the full dim."""
    for c in candidates:
        if dim % c == 0:
            return c
    return dim


def _vmem_limit(footprint_bytes):
    """Explicit scoped-VMEM request with headroom, capped for v7x (64 MiB/TC)."""
    return int(min(max(int(footprint_bytes * 1.5), 32 * 1024 * 1024),
                   56 * 1024 * 1024))


# ---------------------------------------------------------------------------
# Tiled linear: matmul + bias + optional activation and/or fused residual+LN
# ---------------------------------------------------------------------------

def _linear_kernel(*refs, activation, fuse_ln, eps, multi_k, k_axis):
    if multi_k:
        acc_ref = refs[-1]
        refs = refs[:-1]
    o_ref = refs[-1]
    in_refs = refs[:-1]
    if fuse_ln:
        x_ref, w_ref, b_ref, r_ref, g_ref, bb_ref = in_refs
    else:
        x_ref, w_ref, b_ref = in_refs

    def epilogue(acc):
        y = acc + b_ref[...].astype(jnp.float32)
        if activation == "gelu":
            # TODO(synk): tanh-approx GELU; HF BERT default is exact erf GELU.
            c = math.sqrt(2.0 / math.pi)
            y = 0.5 * y * (1.0 + jnp.tanh(c * (y + 0.044715 * y * y * y)))
        elif activation == "tanh":
            y = jnp.tanh(y)
        if fuse_ln:
            y = y + r_ref[...].astype(jnp.float32)
            mean = jnp.mean(y, axis=-1, keepdims=True)
            var = jnp.mean(jnp.square(y - mean), axis=-1, keepdims=True)
            y = (y - mean) * lax.rsqrt(var + eps)
            y = y * g_ref[...].astype(jnp.float32) + bb_ref[...].astype(jnp.float32)
        o_ref[...] = y.astype(o_ref.dtype)

    if multi_k:
        @pl.when(pl.program_id(k_axis) == 0)
        def _():
            acc_ref[...] = jnp.zeros_like(acc_ref)

        acc_ref[...] += jnp.dot(x_ref[...], w_ref[...],
                                preferred_element_type=jnp.float32)

        @pl.when(pl.program_id(k_axis) == pl.num_programs(k_axis) - 1)
        def _():
            epilogue(acc_ref[...])
    else:
        # Single k step: no accumulator scratch, no predication.
        epilogue(jnp.dot(x_ref[...], w_ref[...],
                         preferred_element_type=jnp.float32))


def linear(x, w, b, activation="none",
           residual=None, ln_gamma=None, ln_beta=None, ln_eps=1e-12):
    """y = act(x @ w + b); optionally followed by LayerNorm(y + residual).

    x: (M, K), w: (K, N), b: (N,).  When residual/ln_gamma/ln_beta are given,
    the residual-add + LayerNorm is fused into the final epilogue (tn == N).
    """
    M, K = x.shape
    Kw, N = w.shape
    assert K == Kw
    fuse_ln = residual is not None
    itemsize = x.dtype.itemsize

    tm = _pick_tile(M, (512, 256, 128))
    tn = N if fuse_ln else _pick_tile(N, (1024, 768, 512, 384, 256, 128))
    tk = K if K <= 1024 else _pick_tile(K, (1024, 768, 512, 256))
    nm, nj, nk = M // tm, N // tn, K // tk
    multi_k = nk > 1

    b2 = b.reshape(1, N).astype(jnp.float32)
    args = [x, w, b2]
    if fuse_ln:
        args += [residual,
                 ln_gamma.reshape(1, N).astype(jnp.float32),
                 ln_beta.reshape(1, N).astype(jnp.float32)]

    if fuse_ln:
        if multi_k:
            grid = (nm, nk)
            k_axis = 1
            in_specs = [
                pl.BlockSpec((tm, tk), lambda i, k: (i, k)),
                pl.BlockSpec((tk, N), lambda i, k: (k, 0)),
                pl.BlockSpec((1, N), lambda i, k: (0, 0)),
                pl.BlockSpec((tm, N), lambda i, k: (i, 0)),
                pl.BlockSpec((1, N), lambda i, k: (0, 0)),
                pl.BlockSpec((1, N), lambda i, k: (0, 0)),
            ]
            out_spec = pl.BlockSpec((tm, N), lambda i, k: (i, 0))
            dims = ("parallel", "arbitrary")
        else:
            grid = (nm,)
            k_axis = 0
            in_specs = [
                pl.BlockSpec((tm, K), lambda i: (i, 0)),
                pl.BlockSpec((K, N), lambda i: (0, 0)),
                pl.BlockSpec((1, N), lambda i: (0, 0)),
                pl.BlockSpec((tm, N), lambda i: (i, 0)),
                pl.BlockSpec((1, N), lambda i: (0, 0)),
                pl.BlockSpec((1, N), lambda i: (0, 0)),
            ]
            out_spec = pl.BlockSpec((tm, N), lambda i: (i, 0))
            dims = ("parallel",)
    else:
        if multi_k:
            grid = (nm, nj, nk)
            k_axis = 2
            in_specs = [
                pl.BlockSpec((tm, tk), lambda i, j, k: (i, k)),
                pl.BlockSpec((tk, tn), lambda i, j, k: (k, j)),
                pl.BlockSpec((1, tn), lambda i, j, k: (0, j)),
            ]
            out_spec = pl.BlockSpec((tm, tn), lambda i, j, k: (i, j))
            dims = ("parallel", "parallel", "arbitrary")
        else:
            grid = (nm, nj)
            k_axis = 1  # unused
            in_specs = [
                pl.BlockSpec((tm, K), lambda i, j: (i, 0)),
                pl.BlockSpec((K, tn), lambda i, j: (0, j)),
                pl.BlockSpec((1, tn), lambda i, j: (0, j)),
            ]
            out_spec = pl.BlockSpec((tm, tn), lambda i, j: (i, j))
            dims = ("parallel", "parallel")

    scratch = [pltpu.VMEM((tm, tn), jnp.float32)] if multi_k else []

    footprint = (2 * (tm * tk + tk * tn) * itemsize       # double-buffered x, w
                 + 2 * tm * tn * itemsize                 # output tile
                 + (tm * tn * 4 if multi_k else 0)        # f32 accumulator
                 + (2 * tm * tn * itemsize if fuse_ln else 0)  # residual tile
                 + 8 * tn * 4)                            # bias / gamma / beta

    n_trans = M * N if activation in ("gelu", "tanh") else 0
    if fuse_ln:
        n_trans += M
    bytes_accessed = (M * K + K * N + 2 * M * N) * itemsize + N * 4
    if fuse_ln:
        bytes_accessed += M * N * itemsize + 2 * N * 4

    return pl.pallas_call(
        functools.partial(_linear_kernel, activation=activation,
                          fuse_ln=fuse_ln, eps=ln_eps,
                          multi_k=multi_k, k_axis=k_axis),
        out_shape=jax.ShapeDtypeStruct((M, N), x.dtype),
        grid=grid,
        in_specs=in_specs,
        out_specs=out_spec,
        scratch_shapes=scratch,
        compiler_params=pltpu.CompilerParams(
            dimension_semantics=dims,
            vmem_limit_bytes=_vmem_limit(footprint)),
        cost_estimate=pl.CostEstimate(
            flops=2 * M * N * K,
            transcendentals=n_trans,
            bytes_accessed=bytes_accessed),
    )(*args)


# ---------------------------------------------------------------------------
# Row-tiled LayerNorm (used only for the embedding LN; the per-layer LNs are
# fused into the preceding linear's epilogue)
# ---------------------------------------------------------------------------

def _layernorm_kernel(x_ref, g_ref, b_ref, o_ref, *, eps):
    x = x_ref[...].astype(jnp.float32)
    mean = jnp.mean(x, axis=-1, keepdims=True)
    var = jnp.mean(jnp.square(x - mean), axis=-1, keepdims=True)
    y = (x - mean) * lax.rsqrt(var + eps)
    y = y * g_ref[...].astype(jnp.float32) + b_ref[...].astype(jnp.float32)
    o_ref[...] = y.astype(o_ref.dtype)


def layernorm(x, gamma, beta, eps=1e-12):
    M, H = x.shape
    tm = _pick_tile(M, (1024, 512, 256, 128))
    row_spec = pl.BlockSpec((tm, H), lambda i: (i, 0))
    vec_spec = pl.BlockSpec((1, H), lambda i: (0, 0))
    return pl.pallas_call(
        functools.partial(_layernorm_kernel, eps=eps),
        out_shape=jax.ShapeDtypeStruct((M, H), x.dtype),
        grid=(M // tm,),
        in_specs=[row_spec, vec_spec, vec_spec],
        out_specs=row_spec,
        compiler_params=pltpu.CompilerParams(dimension_semantics=("parallel",)),
    )(x, gamma.reshape(1, H).astype(jnp.float32),
      beta.reshape(1, H).astype(jnp.float32))


# ---------------------------------------------------------------------------
# Multi-head self-attention on the fused QKV tensor
#   grid = (batch, query blocks); per-head Ref slices; lane-dense paired stores
# ---------------------------------------------------------------------------

def _attention_kernel(qkv_ref, bias_ref, o_ref, *, num_heads, head_dim, scale, tq):
    H = num_heads * head_dim
    d = head_dim
    q0 = pl.multiple_of(pl.program_id(1) * tq, tq)
    bias = bias_ref[...].astype(jnp.float32)              # (1, S) additive key mask

    # Heads processed in pairs; each pair writes a 2*head_dim-wide lane slab
    # directly into o_ref (no per-head context list, no whole-H concatenate).
    # TODO(synk): for very long sequences also tile the KV axis with an online
    # softmax (flash-style) so the (tq, S) score matrix is bounded too.
    step = 2 if num_heads % 2 == 0 else 1
    for h0 in range(0, num_heads, step):
        parts = []
        for h in range(h0, h0 + step):
            # Ref slices: only one head's (tq, d)/(S, d) slabs are materialized.
            q = qkv_ref[pl.ds(q0, tq), pl.ds(h * d, d)] * scale   # scale folded into q
            k = qkv_ref[:, pl.ds(H + h * d, d)]
            v = qkv_ref[:, pl.ds(2 * H + h * d, d)]
            # q @ k^T via dot_general contracting the last dims (no explicit .T).
            s = lax.dot_general(q, k, (((1,), (1,)), ((), ())),
                                preferred_element_type=jnp.float32)
            s = s + bias
            m = jnp.max(s, axis=-1, keepdims=True)
            p = jnp.exp(s - m)
            denom = jnp.sum(p, axis=-1, keepdims=True)            # (tq, 1)
            ctx = jnp.dot(p.astype(qkv_ref.dtype), v,
                          preferred_element_type=jnp.float32)      # (tq, d)
            # Normalize the small (tq, d) context, not the (tq, S) prob matrix.
            parts.append(ctx * pl.reciprocal(denom, approx=True))
        slab = parts[0] if step == 1 else jnp.concatenate(parts, axis=-1)
        o_ref[:, h0 * d:(h0 + step) * d] = slab.astype(o_ref.dtype)


def attention(qkv, mask_bias, num_heads):
    """qkv: (B, S, 3H) fused projections; mask_bias: (B, 1, S) additive bias."""
    B, S, threeH = qkv.shape
    H = threeH // 3
    head_dim = H // num_heads
    scale = 1.0 / math.sqrt(head_dim)
    tq = _pick_tile(S, (256, 128))
    itemsize = qkv.dtype.itemsize

    footprint = (2 * S * threeH * itemsize      # resident KV block (double-buffered)
                 + 2 * tq * H * itemsize        # output block
                 + 2 * tq * S * 4               # f32 scores / probs for one head
                 + 2 * S * 4)                   # bias
    cost = pl.CostEstimate(
        flops=4 * B * num_heads * S * S * head_dim,
        transcendentals=B * num_heads * S * S,
        bytes_accessed=B * S * (threeH + H) * itemsize + B * S * 4,
    )
    return pl.pallas_call(
        functools.partial(_attention_kernel, num_heads=num_heads,
                          head_dim=head_dim, scale=scale, tq=tq),
        out_shape=jax.ShapeDtypeStruct((B, S, H), qkv.dtype),
        grid=(B, S // tq),
        in_specs=[
            pl.BlockSpec((None, S, threeH), lambda b, qi: (b, 0, 0)),
            pl.BlockSpec((None, 1, S), lambda b, qi: (b, 0, 0)),
        ],
        out_specs=pl.BlockSpec((None, tq, H), lambda b, qi: (b, qi, 0)),
        compiler_params=pltpu.CompilerParams(
            dimension_semantics=("parallel", "parallel"),
            vmem_limit_bytes=_vmem_limit(footprint)),
        cost_estimate=cost,
    )(qkv, mask_bias)


# ---------------------------------------------------------------------------
# Deterministic parameter init (synthetic BERT + classifier head)
# ---------------------------------------------------------------------------

def init_params(key, cfg):
    H, F = cfg["hidden"], cfg["ffn"]
    keys = iter(jax.random.split(key, 64))

    def w(shape, scale=0.02, dtype=jnp.bfloat16):
        return (scale * jax.random.normal(next(keys), shape)).astype(dtype)

    def zeros(shape):
        return jnp.zeros(shape, jnp.float32)

    def ones(shape):
        return jnp.ones(shape, jnp.float32)

    embeddings = dict(
        word=w((cfg["vocab_size"], H)),
        pos=w((cfg["max_pos"], H)),
        type=w((cfg["type_vocab"], H)),
        ln_g=ones((H,)), ln_b=zeros((H,)),
    )
    layers = []
    for _ in range(cfg["num_layers"]):
        layers.append(dict(
            wqkv=w((H, 3 * H)), bqkv=zeros((3 * H,)),   # fused Q|K|V projection
            wo=w((H, H)), bo=zeros((H,)),
            ln1_g=ones((H,)), ln1_b=zeros((H,)),
            w1=w((H, F)), b1=zeros((F,)),
            w2=w((F, H)), b2=zeros((H,)),
            ln2_g=ones((H,)), ln2_b=zeros((H,)),
        ))
    return dict(
        cfg=cfg,
        embeddings=embeddings,
        layers=layers,
        pooler_w=w((H, H)), pooler_b=zeros((H,)),
        cls_w=w((H, cfg["num_classes"]), dtype=jnp.float32),
        cls_b=zeros((cfg["num_classes"],)),
    )


# ---------------------------------------------------------------------------
# Forward pass (mirrors BERTClassifier.forward)
# ---------------------------------------------------------------------------

def bert_classifier_forward(params, token_ids, valid_length, segment_ids):
    cfg = params["cfg"]
    B, S = token_ids.shape
    H = cfg["hidden"]
    NH = cfg["num_heads"]

    # gen_attention_mask: attention_mask[i, :valid_length[i]] = 1 (float)
    mask = (jnp.arange(S)[None, :] < valid_length[:, None]).astype(jnp.float32)
    mask_bias = ((1.0 - mask) * -1e9).reshape(B, 1, S)

    # BERT embeddings (lookup is glue; LayerNorm is a Pallas kernel)
    emb = params["embeddings"]
    x = (jnp.take(emb["word"], token_ids, axis=0)
         + emb["pos"][None, :S, :]
         + jnp.take(emb["type"], segment_ids.astype(jnp.int32), axis=0))
    x = layernorm(x.reshape(B * S, H).astype(jnp.bfloat16),
                  emb["ln_g"], emb["ln_b"])                      # (B*S, H) bf16

    # Transformer encoder layers
    for lyr in params["layers"]:
        h2 = x                                                    # (B*S, H)
        qkv = linear(h2, lyr["wqkv"], lyr["bqkv"])                # (B*S, 3H)
        ctx = attention(qkv.reshape(B, S, 3 * H), mask_bias, NH)  # (B, S, H)
        # wo projection with fused residual-add + LayerNorm epilogue
        x1 = linear(ctx.reshape(B * S, H), lyr["wo"], lyr["bo"],
                    residual=h2, ln_gamma=lyr["ln1_g"], ln_beta=lyr["ln1_b"])
        ff = linear(x1, lyr["w1"], lyr["b1"], activation="gelu")
        # w2 projection with fused residual-add + LayerNorm epilogue
        x = linear(ff, lyr["w2"], lyr["b2"],
                   residual=x1, ln_gamma=lyr["ln2_g"], ln_beta=lyr["ln2_b"])

    # BERT pooler: tanh(Linear(CLS token)).  M = B rows -> keep in plain XLA
    # (a Pallas launch would pad M to 8 sublanes and pay fixed call cost).
    x = x.reshape(B, S, H)
    cls_tok = x[:, 0, :].astype(jnp.float32)                      # (B, H)
    pooler = jnp.tanh(cls_tok @ params["pooler_w"].astype(jnp.float32)
                      + params["pooler_b"])

    # TODO(synk): nn.Dropout(p=dr_rate) is identity at inference; stochastic
    # training dropout is not implemented here.
    # Classifier head (num_classes=2): lane-sparse output, leave in plain XLA.
    logits = pooler @ params["cls_w"] + params["cls_b"]
    return logits


# ---------------------------------------------------------------------------
# Main
# ---------------------------------------------------------------------------

if __name__ == "__main__":
    cfg = dict(vocab_size=64, hidden=32, num_heads=2, num_layers=2,
               ffn=64, max_pos=8, type_vocab=2, num_classes=2)
    B, S = 2, 8

    root = jax.random.PRNGKey(0)
    k_params, k_tok, k_seg = jax.random.split(root, 3)
    params = init_params(k_params, cfg)

    token_ids = jax.random.randint(k_tok, (B, S), 0, cfg["vocab_size"],
                                   dtype=jnp.int32)
    valid_length = jnp.array([8, 5], dtype=jnp.int32)
    segment_ids = jax.random.randint(k_seg, (B, S), 0, cfg["type_vocab"],
                                     dtype=jnp.int32)

    logits = bert_classifier_forward(params, token_ids, valid_length, segment_ids)
    jax.block_until_ready(logits)
    assert logits.shape == (B, cfg["num_classes"])
    print("KERNEL_OK")
</pallas_src>

<mosaic_0001>
module attributes {stable_mosaic.version = 11 : i64} {
  func.func @_layernorm_kernel(%arg0: i32, %arg1: memref<16x32xbf16, #tpu.memory_space<vmem>>, %arg2: memref<1x32xf32, #tpu.memory_space<vmem>>, %arg3: memref<1x32xf32, #tpu.memory_space<vmem>>, %arg4: memref<16x32xbf16, #tpu.memory_space<vmem>>) attributes {dimension_semantics = [#tpu.dimension_semantics<parallel>], iteration_bounds = array<i64: 1>, scalar_prefetch = 0 : i64, scratch_operands = 0 : i64, tpu.core_type = #tpu.core_type<tc>, window_params = [{transform_indices = @transform_0, window_bounds = array<i64: 16, 32>}, {pipeline_mode = #tpu.pipeline_mode<synchronous>, transform_indices = @transform_1, window_bounds = array<i64: 1, 32>}, {pipeline_mode = #tpu.pipeline_mode<synchronous>, transform_indices = @transform_2, window_bounds = array<i64: 1, 32>}, {transform_indices = @transform_3, window_bounds = array<i64: 16, 32>}]} {
    %c0 = arith.constant 0 : index
    %c0_0 = arith.constant 0 : index
    %0 = vector.load %arg1[%c0, %c0_0] : memref<16x32xbf16, #tpu.memory_space<vmem>>, vector<16x32xbf16>
    %1 = arith.extf %0 : vector<16x32xbf16> to vector<16x32xf32>
    %cst = arith.constant dense<0.000000e+00> : vector<16xf32>
    %2 = vector.multi_reduction <add>, %1, %cst [1] : vector<16x32xf32> to vector<16xf32>
    %3 = vector.shape_cast %2 : vector<16xf32> to vector<16x1xf32>
    %cst_1 = arith.constant 3.200000e+01 : f32
    %4 = vector.broadcast %cst_1 : f32 to vector<16x1xf32>
    %5 = arith.divf %3, %4 : vector<16x1xf32>
    %6 = vector.broadcast %5 : vector<16x1xf32> to vector<16x32xf32>
    %7 = arith.subf %1, %6 : vector<16x32xf32>
    %8 = arith.mulf %7, %7 : vector<16x32xf32>
    %cst_2 = arith.constant dense<0.000000e+00> : vector<16xf32>
    %9 = vector.multi_reduction <add>, %8, %cst_2 [1] : vector<16x32xf32> to vector<16xf32>
    %10 = vector.shape_cast %9 : vector<16xf32> to vector<16x1xf32>
    %cst_3 = arith.constant 3.200000e+01 : f32
    %11 = vector.broadcast %cst_3 : f32 to vector<16x1xf32>
    %12 = arith.divf %10, %11 : vector<16x1xf32>
    %13 = vector.broadcast %5 : vector<16x1xf32> to vector<16x32xf32>
    %14 = arith.subf %1, %13 : vector<16x32xf32>
    %cst_4 = arith.constant 9.99999996E-13 : f32
    %15 = vector.broadcast %cst_4 : f32 to vector<16x1xf32>
    %16 = arith.addf %12, %15 : vector<16x1xf32>
    %17 = math.rsqrt %16 : vector<16x1xf32>
    %18 = vector.broadcast %17 : vector<16x1xf32> to vector<16x32xf32>
    %19 = arith.mulf %14, %18 : vector<16x32xf32>
    %c0_5 = arith.constant 0 : index
    %c0_6 = arith.constant 0 : index
    %20 = vector.load %arg2[%c0_5, %c0_6] : memref<1x32xf32, #tpu.memory_space<vmem>>, vector<1x32xf32>
    %21 = vector.broadcast %20 : vector<1x32xf32> to vector<16x32xf32>
    %22 = arith.mulf %19, %21 : vector<16x32xf32>
    %c0_7 = arith.constant 0 : index
    %c0_8 = arith.constant 0 : index
    %23 = vector.load %arg3[%c0_7, %c0_8] : memref<1x32xf32, #tpu.memory_space<vmem>>, vector<1x32xf32>
    %24 = vector.broadcast %23 : vector<1x32xf32> to vector<16x32xf32>
    %25 = arith.addf %22, %24 : vector<16x32xf32>
    %26 = arith.truncf %25 : vector<16x32xf32> to vector<16x32xbf16>
    %c0_9 = arith.constant 0 : index
    %c0_10 = arith.constant 0 : index
    %27 = vector.load %arg4[%c0_9, %c0_10] : memref<16x32xbf16, #tpu.memory_space<vmem>>, vector<16x32xbf16>
    tpu.vector_store %arg4[%c0_9, %c0_10], %26 {strides = array<i32>} : memref<16x32xbf16, #tpu.memory_space<vmem>>, vector<16x32xbf16>,
    return
  }
  func.func @transform_0(%arg0: i32) -> (i32, i32) {
    %c0_i32 = arith.constant 0 : i32
    %c0_i32_0 = arith.constant 0 : i32
    return %arg0, %c0_i32 : i32, i32
  }
  func.func @transform_1(%arg0: i32) -> (i32, i32) {
    %c0_i32 = arith.constant 0 : i32
    %c0_i32_0 = arith.constant 0 : i32
    %c0_i32_1 = arith.constant 0 : i32
    return %c0_i32, %c0_i32_0 : i32, i32
  }
  func.func @transform_2(%arg0: i32) -> (i32, i32) {
    %c0_i32 = arith.constant 0 : i32
    %c0_i32_0 = arith.constant 0 : i32
    %c0_i32_1 = arith.constant 0 : i32
    return %c0_i32, %c0_i32_0 : i32, i32
  }
  func.func @transform_3(%arg0: i32) -> (i32, i32) {
    %c0_i32 = arith.constant 0 : i32
    %c0_i32_0 = arith.constant 0 : i32
    return %arg0, %c0_i32 : i32, i32
  }
}

</mosaic_0001>

<llo_original>
// kernel: tpu_custom_call.1
$region0: #{tpu_custom_call.1}
  #allocation0 [shape = 'u32[]', space=smem, size = 0x4, offset = 0x4, fixed_abs, tag = 'smem constant byte address 0x4 - core index']
  #allocation1 [shape = 'u32[144,128]{1,0:T(1,128)}', space=vmem, size = 0x12000, scoped, tag = 'internal scratch']
  %s0 = inlined_call_operand.hbm [shape: bf16[16,32], index: 0, kind: input, shape index: {}]
  %s1 = inlined_call_operand.vmem [shape: f32[1,32], index: 1, kind: input, shape index: {}]
  %s2 = inlined_call_operand.vmem [shape: f32[1,32], index: 2, kind: input, shape index: {}]
  %s3 = inlined_call_operand.hbm [shape: bf16[16,32], index: 3, kind: output, shape index: {}]
  %s4 = sld [smem:[#allocation0]]
  $region26: #{tpu_custom_call.1} parent=0
    _
  %s6 = ssub.s32 1, %s4
  %s7 = scalar_select 0, %s6, %s4
  $region1: #{tpu_custom_call.1} parent=0
    #allocation2 [shape = 'u8[4096]{0}', space=vmem, size = 0x1000, scoped, tag = 'input window, operand 0, single buffered']
    #allocation3 [shape = 's32[1]{0}', space=sflag, size = 0x4, scoped, tag = 'scoped memory for tpu_custom_call.1']
    #allocation4 [shape = 's32[1]{0}', space=sflag, size = 0x4, scoped, tag = 'scoped memory for tpu_custom_call.1']
    #allocation5 [shape = 'u8[4096]{0}', space=vmem, size = 0x1000, scoped, tag = 'output window, operand 0, single buffered']
    %8 = vsyncpa [#allocation3], 0
    %9 = vsyncpa [#allocation4], 0
    // Predicated region
    $region2: #{tpu_custom_call.1} parent=1 // pred_check
      _
    $region3: #{tpu_custom_call.1} parent=1 // pred_check_branch
      %11 = sbr.rel (0) target = $region5
    $region4: #{tpu_custom_call.1} parent=1 // pred_region
      %s13 = ssub.s32 128, 128
      %14 = vsyncadd [#allocation3], %s13
      %s15 = sshll.u32 [#allocation2], 4
      %s16 = int_to_ptr.vmem [resolvable:$true] %s15
      %21 = dma.hbm_to_vmem [thread:$0]  %s0, 128, %s16, [#allocation3], 64, 64, 4
    $region5: #{tpu_custom_call.1} parent=1 // pred_fallthru
      _
    // Predicated region
    $region6: #{tpu_custom_call.1} parent=1 // pred_check
      _
    $region7: #{tpu_custom_call.1} parent=1 // pred_check_branch
      %23 = sbr.rel (0) target = $region9
    $region8: #{tpu_custom_call.1} parent=1 // pred_region
      _
    $region9: #{tpu_custom_call.1} parent=1 // pred_fallthru
      _
    // Predicated region
    $region10: #{tpu_custom_call.1} parent=1 // pred_check
      _
    $region11: #{tpu_custom_call.1} parent=1 // pred_check_branch
      %25 = sbr.rel (0) target = $region13
    $region12: #{tpu_custom_call.1} parent=1 // pred_region
      _
    $region13: #{tpu_custom_call.1} parent=1 // pred_fallthru
      _
    // Predicated region
    $region14: #{tpu_custom_call.1} parent=1 // pred_check
      _
    $region15: #{tpu_custom_call.1} parent=1 // pred_check_branch
      %27 = sbr.rel (0) target = $region17
    $region16: #{tpu_custom_call.1} parent=1 // pred_region
      %28 = dma.done [#allocation3], 128
    $region17: #{tpu_custom_call.1} parent=1 // pred_fallthru
      _
    %v29 = vld [vmem:[#allocation2] sm:$0xf]
    %v30 = vld [vmem:[#allocation2 + $0x4] sm:$0xf]
    %v31 = vunpack.c.l.bf16 %v29
    %v32 = vunpack.c.l.bf16 %v30
    %vm33 = vcmask 261120
    %v34 = vsel %vm33, %v31, 0.0
    %35 = vadd.xlane.f32.xlu0 %v34
    %v36 = vpop.xlane.xlu0 %35
    %v37 = vsel %vm33, %v32, 0.0
    %38 = vadd.xlane.f32.xlu0 %v37
    %v39 = vpop.xlane.xlu0 %38
    %v40 = vrcp.pop 32.0
    %v41 = vmul.f32 %v36, %v40
    %v42 = vmul.f32 %v39, %v40
    %v43 = vsub.f32 %v31, %v41
    %v44 = vsub.f32 %v32, %v42
    %v45 = vmul.f32 %v43, %v43
    %v46 = vmul.f32 %v44, %v44
    %v47 = vsel %vm33, %v45, 0.0
    %48 = vadd.xlane.f32.xlu0 %v47
    %v49 = vpop.xlane.xlu0 %48
    %v50 = vsel %vm33, %v46, 0.0
    %51 = vadd.xlane.f32.xlu0 %v50
    %v52 = vpop.xlane.xlu0 %51
    %v53 = vmul.f32 %v49, %v40
    %v54 = vmul.f32 %v52, %v40
    %v55 = vadd.f32 %v53, 1e-12
    %v56 = vadd.f32 %v54, 1e-12
    %v57 = vrsqrt.pop %v55
    %v58 = vrsqrt.pop %v56
    %v59 = vmul.f32 %v43, %v57
    %v60 = vmul.f32 %v44, %v58
    %v61 = vld [vmem:[%s1] sm:$0x1]
    %v63 = vlaneseq
    %v64 = vshrl.u32 %v63, 7
    %v65 = vsub.s32 0, %v64
    %v66 = vrot.slane %v61, %v65
    %v68 = vmul.f32 %v59, %v66
    %v69 = vmul.f32 %v60, %v66
    %v70 = vld [vmem:[%s2] sm:$0x1]
    %v72 = vlaneseq
    %v73 = vshrl.u32 %v72, 7
    %v74 = vsub.s32 0, %v73
    %v75 = vrot.slane %v70, %v74
    %v77 = vadd.f32 %v68, %v75
    %v78 = vadd.f32 %v69, %v75
    %v79 = vpack.c.bf16 %v78, %v77
    %v81 = vunpack.c.l.b16 %v79
    %v82 = vunpack.c.h.b16 %v79
    %v83 = vpack.c.b16 %v81, %v81
    %v84 = vpack.c.b16 %v82, %v82
    %vm87 = vcmask 257024
    %88 = vst.msk [vmem:[#allocation5] sm:$0xf] %vm87, %v83
    %89 = vst.msk [vmem:[#allocation5 + $0x4] sm:$0xf] %vm87, %v84
    // Predicated region
    $region18: #{tpu_custom_call.1} parent=1 // pred_check
      _
    $region19: #{tpu_custom_call.1} parent=1 // pred_check_branch
      %91 = sbr.rel (0) target = $region21
    $region20: #{tpu_custom_call.1} parent=1 // pred_region
      %s93 = ssub.s32 128, 128
      %94 = vsyncadd [#allocation4], %s93
      %s95 = sshll.u32 [#allocation5], 4
      %s96 = int_to_ptr.vmem [resolvable:$true] %s95
      %101 = dma.vmem_to_hbm [thread:$0]  %s96, 128, %s3, [#allocation4], 64, 64, 4
    $region21: #{tpu_custom_call.1} parent=1 // pred_fallthru
      _
    // Predicated region
    $region22: #{tpu_custom_call.1} parent=1 // pred_check
      _
    $region23: #{tpu_custom_call.1} parent=1 // pred_check_branch
      %103 = sbr.rel (0) target = $region25
    $region24: #{tpu_custom_call.1} parent=1 // pred_region
      %104 = dma.done [#allocation4], 128
    $region25: #{tpu_custom_call.1} parent=1 // pred_fallthru
      _
    %105 = vsyncpa [#allocation3], 1
    %106 = vsyncpa [#allocation4], 1

</llo_original>
